<compile_context>
chip_gen: v6e
topology: v6e:2x2x1
jax: 0.10.0
libtpu: 0.0.40
codegen_flags: <defaults>
</compile_context>

<pallas_src>
import math

import jax
import jax.numpy as jnp
from jax.experimental import pallas as pl
from jax.experimental.pallas import tpu as pltpu

_SQRT_HALF = 0.7071067811865476


def _round_up(x: int, m: int) -> int:
    return ((x + m - 1) // m) * m


def _erf_approx(z):
    # Abramowitz & Stegun 7.1.26, max abs error 1.5e-7.
    a1, a2, a3, a4, a5 = (0.254829592, -0.284496736, 1.421413741,
                          -1.453152027, 1.061405429)
    p = 0.3275911
    az = jnp.abs(z)
    t = 1.0 / (1.0 + p * az)
    poly = ((((a5 * t + a4) * t + a3) * t + a2) * t + a1) * t
    e = 1.0 - poly * jnp.exp(-az * az)
    return jnp.where(z >= 0.0, e, -e)


def _gelu_exact(x):
    # 0.5 * x * (1 + erf(x / sqrt(2)))  -- matches torch.nn.functional.gelu default.
    return 0.5 * x * (1.0 + _erf_approx(x * _SQRT_HALF))


def _mlp_kernel(x_ref, w1_ref, b1_ref, w2_ref, b2_ref, out_ref):
    # x_ref: (TM, D_in); w1_ref: (D_in, H); b1_ref: (1, H)
    # w2_ref: (H, D_out); b2_ref: (1, D_out); out_ref: (TM, D_out)
    x = x_ref[...]
    h = jnp.dot(x, w1_ref[...], preferred_element_type=jnp.float32) + b1_ref[...]
    h = _gelu_exact(h)
    # dropout1: identity in eval mode
    y = jnp.dot(h, w2_ref[...], preferred_element_type=jnp.float32) + b2_ref[...]
    # dropout2: identity in eval mode
    out_ref[...] = y.astype(out_ref.dtype)


def patchtsmixer_vae_mlp(inputs, w1, b1, w2, b2, *, row_tile=256):
    """inputs: (B, C, P, d_in) float32; w1: (d_in, H); b1: (H,);
    w2: (H, d_out); b2: (d_out,).  Returns (B, C, P, d_out)."""
    orig_shape = inputs.shape
    d_in = orig_shape[-1]
    d_hidden = w1.shape[1]
    d_out = w2.shape[1]

    m = math.prod(orig_shape[:-1])
    x2 = inputs.reshape(m, d_in)

    # Large row tiles (multiple of 8 sublanes); pad rows so the grid divides evenly.
    tm = min(row_tile, _round_up(m, 8))
    m_pad = _round_up(m, tm)
    if m_pad != m:
        x2 = jnp.pad(x2, ((0, m_pad - m), (0, 0)))

    grid = (m_pad // tm,)

    out = pl.pallas_call(
        _mlp_kernel,
        out_shape=jax.ShapeDtypeStruct((m_pad, d_out), inputs.dtype),
        grid_spec=pltpu.PrefetchScalarGridSpec(
            num_scalar_prefetch=0,
            grid=grid,
            in_specs=[
                pl.BlockSpec((tm, d_in), lambda i: (i, 0)),
                pl.BlockSpec((d_in, d_hidden), lambda i: (0, 0)),
                pl.BlockSpec((1, d_hidden), lambda i: (0, 0)),
                pl.BlockSpec((d_hidden, d_out), lambda i: (0, 0)),
                pl.BlockSpec((1, d_out), lambda i: (0, 0)),
            ],
            out_specs=pl.BlockSpec((tm, d_out), lambda i: (i, 0)),
        ),
        compiler_params=pltpu.CompilerParams(
            dimension_semantics=("parallel",),
        ),
    )(x2, w1, b1.reshape(1, d_hidden), w2, b2.reshape(1, d_out))

    if m_pad != m:
        out = out[:m]
    return out.reshape(*orig_shape[:-1], d_out)


def _reference(inputs, w1, b1, w2, b2):
    h = jax.nn.gelu(inputs @ w1 + b1, approximate=False)
    return h @ w2 + b2


if __name__ == "__main__":
    key = jax.random.PRNGKey(0)
    k0, k1, k2, k3, k4 = jax.random.split(key, 5)

    # batch=2, num_channels=4, num_patches=8, d_model=32, expansion_factor=2
    B, C, P, D = 2, 4, 8, 32
    H = D * 2           # in_features * expansion_factor
    D_OUT = D           # out_features

    x = jax.random.normal(k0, (B, C, P, D), dtype=jnp.float32)
    w1 = jax.random.normal(k1, (D, H), dtype=jnp.float32) * 0.1
    b1 = jax.random.normal(k2, (H,), dtype=jnp.float32) * 0.1
    w2 = jax.random.normal(k3, (H, D_OUT), dtype=jnp.float32) * 0.1
    b2 = jax.random.normal(k4, (D_OUT,), dtype=jnp.float32) * 0.1

    out = patchtsmixer_vae_mlp(x, w1, b1, w2, b2)
    jax.block_until_ready(out)

    ref = _reference(x, w1, b1, w2, b2)
    assert out.shape == x.shape, (out.shape, x.shape)
    assert jnp.allclose(out, ref, atol=1e-5, rtol=1e-5), float(
        jnp.max(jnp.abs(out - ref)))

    print("KERNEL_OK")
</pallas_src>

<mosaic_0001>
module attributes {stable_mosaic.version = 11 : i64} {
  func.func @_mlp_kernel(%arg0: i32, %arg1: memref<64x32xf32, #tpu.memory_space<vmem>>, %arg2: memref<32x64xf32, #tpu.memory_space<vmem>>, %arg3: memref<1x64xf32, #tpu.memory_space<vmem>>, %arg4: memref<64x32xf32, #tpu.memory_space<vmem>>, %arg5: memref<1x32xf32, #tpu.memory_space<vmem>>, %arg6: memref<64x32xf32, #tpu.memory_space<vmem>>) attributes {dimension_semantics = [#tpu.dimension_semantics<parallel>], iteration_bounds = array<i64: 1>, scalar_prefetch = 0 : i64, scratch_operands = 0 : i64, tpu.core_type = #tpu.core_type<tc>, window_params = [{transform_indices = @transform_0, window_bounds = array<i64: 64, 32>}, {pipeline_mode = #tpu.pipeline_mode<synchronous>, transform_indices = @transform_1, window_bounds = array<i64: 32, 64>}, {pipeline_mode = #tpu.pipeline_mode<synchronous>, transform_indices = @transform_2, window_bounds = array<i64: 1, 64>}, {pipeline_mode = #tpu.pipeline_mode<synchronous>, transform_indices = @transform_3, window_bounds = array<i64: 64, 32>}, {pipeline_mode = #tpu.pipeline_mode<synchronous>, transform_indices = @transform_4, window_bounds = array<i64: 1, 32>}, {transform_indices = @transform_5, window_bounds = array<i64: 64, 32>}]} {
    %c0 = arith.constant 0 : index
    %c0_0 = arith.constant 0 : index
    %0 = vector.load %arg1[%c0, %c0_0] : memref<64x32xf32, #tpu.memory_space<vmem>>, vector<64x32xf32>
    %c0_1 = arith.constant 0 : index
    %c0_2 = arith.constant 0 : index
    %1 = vector.load %arg2[%c0_1, %c0_2] : memref<32x64xf32, #tpu.memory_space<vmem>>, vector<32x64xf32>
    %cst = arith.constant dense<0.000000e+00> : vector<64x64xf32>
    %2 = tpu.matmul %0, %1, %cst {dimension_numbers = #tpu.dot_dimension_numbers<[1], [0], [0], [1], [0, 0, 1, 1], [], []>} : vector<64x32xf32>, vector<32x64xf32>, vector<64x64xf32> -> vector<64x64xf32>
    %c0_3 = arith.constant 0 : index
    %c0_4 = arith.constant 0 : index
    %3 = vector.load %arg3[%c0_3, %c0_4] : memref<1x64xf32, #tpu.memory_space<vmem>>, vector<1x64xf32>
    %4 = vector.broadcast %3 : vector<1x64xf32> to vector<64x64xf32>
    %5 = arith.addf %2, %4 : vector<64x64xf32>
    %cst_5 = arith.constant 5.000000e-01 : f32
    %6 = vector.broadcast %cst_5 : f32 to vector<64x64xf32>
    %7 = arith.mulf %6, %5 : vector<64x64xf32>
    %cst_6 = arith.constant 0.707106769 : f32
    %8 = vector.broadcast %cst_6 : f32 to vector<64x64xf32>
    %9 = arith.mulf %5, %8 : vector<64x64xf32>
    %10 = math.absf %9 : vector<64x64xf32>
    %cst_7 = arith.constant 0.327591091 : f32
    %11 = vector.broadcast %cst_7 : f32 to vector<64x64xf32>
    %12 = arith.mulf %11, %10 : vector<64x64xf32>
    %cst_8 = arith.constant 1.000000e+00 : f32
    %13 = vector.broadcast %cst_8 : f32 to vector<64x64xf32>
    %14 = arith.addf %13, %12 : vector<64x64xf32>
    %cst_9 = arith.constant 1.000000e+00 : f32
    %15 = vector.broadcast %cst_9 : f32 to vector<64x64xf32>
    %16 = arith.divf %15, %14 : vector<64x64xf32>
    %cst_10 = arith.constant 1.06140542 : f32
    %17 = vector.broadcast %cst_10 : f32 to vector<64x64xf32>
    %18 = arith.mulf %17, %16 : vector<64x64xf32>
    %cst_11 = arith.constant -1.45315206 : f32
    %19 = vector.broadcast %cst_11 : f32 to vector<64x64xf32>
    %20 = arith.addf %18, %19 : vector<64x64xf32>
    %21 = arith.mulf %20, %16 : vector<64x64xf32>
    %cst_12 = arith.constant 1.42141378 : f32
    %22 = vector.broadcast %cst_12 : f32 to vector<64x64xf32>
    %23 = arith.addf %21, %22 : vector<64x64xf32>
    %24 = arith.mulf %23, %16 : vector<64x64xf32>
    %cst_13 = arith.constant -0.284496725 : f32
    %25 = vector.broadcast %cst_13 : f32 to vector<64x64xf32>
    %26 = arith.addf %24, %25 : vector<64x64xf32>
    %27 = arith.mulf %26, %16 : vector<64x64xf32>
    %cst_14 = arith.constant 0.254829586 : f32
    %28 = vector.broadcast %cst_14 : f32 to vector<64x64xf32>
    %29 = arith.addf %27, %28 : vector<64x64xf32>
    %30 = arith.mulf %29, %16 : vector<64x64xf32>
    %cst_15 = arith.constant 0.000000e+00 : f32
    %31 = vector.broadcast %cst_15 : f32 to vector<64x64xf32>
    %32 = arith.subf %31, %10 : vector<64x64xf32>
    %33 = arith.mulf %32, %10 : vector<64x64xf32>
    %34 = math.exp %33 : vector<64x64xf32>
    %35 = arith.mulf %30, %34 : vector<64x64xf32>
    %cst_16 = arith.constant 1.000000e+00 : f32
    %36 = vector.broadcast %cst_16 : f32 to vector<64x64xf32>
    %37 = arith.subf %36, %35 : vector<64x64xf32>
    %cst_17 = arith.constant 0.000000e+00 : f32
    %38 = vector.broadcast %cst_17 : f32 to vector<64x64xf32>
    %39 = arith.cmpf oge, %9, %38 : vector<64x64xf32>
    %cst_18 = arith.constant 0.000000e+00 : f32
    %40 = vector.broadcast %cst_18 : f32 to vector<64x64xf32>
    %41 = arith.subf %40, %37 : vector<64x64xf32>
    %42 = arith.select %39, %37, %41 : vector<64x64xi1>, vector<64x64xf32>
    %cst_19 = arith.constant 1.000000e+00 : f32
    %43 = vector.broadcast %cst_19 : f32 to vector<64x64xf32>
    %44 = arith.addf %43, %42 : vector<64x64xf32>
    %45 = arith.mulf %7, %44 : vector<64x64xf32>
    %c0_20 = arith.constant 0 : index
    %c0_21 = arith.constant 0 : index
    %46 = vector.load %arg4[%c0_20, %c0_21] : memref<64x32xf32, #tpu.memory_space<vmem>>, vector<64x32xf32>
    %cst_22 = arith.constant dense<0.000000e+00> : vector<64x32xf32>
    %47 = tpu.matmul %45, %46, %cst_22 {dimension_numbers = #tpu.dot_dimension_numbers<[1], [0], [0], [1], [0, 0, 1, 1], [], []>} : vector<64x64xf32>, vector<64x32xf32>, vector<64x32xf32> -> vector<64x32xf32>
    %c0_23 = arith.constant 0 : index
    %c0_24 = arith.constant 0 : index
    %48 = vector.load %arg5[%c0_23, %c0_24] : memref<1x32xf32, #tpu.memory_space<vmem>>, vector<1x32xf32>
    %49 = vector.broadcast %48 : vector<1x32xf32> to vector<64x32xf32>
    %50 = arith.addf %47, %49 : vector<64x32xf32>
    %c0_25 = arith.constant 0 : index
    %c0_26 = arith.constant 0 : index
    %51 = vector.load %arg6[%c0_25, %c0_26] : memref<64x32xf32, #tpu.memory_space<vmem>>, vector<64x32xf32>
    tpu.vector_store %arg6[%c0_25, %c0_26], %50 {strides = array<i32>} : memref<64x32xf32, #tpu.memory_space<vmem>>, vector<64x32xf32>,
    return
  }
  func.func @transform_0(%arg0: i32) -> (i32, i32) {
    %c0_i32 = arith.constant 0 : i32
    %c0_i32_0 = arith.constant 0 : i32
    return %arg0, %c0_i32 : i32, i32
  }
  func.func @transform_1(%arg0: i32) -> (i32, i32) {
    %c0_i32 = arith.constant 0 : i32
    %c0_i32_0 = arith.constant 0 : i32
    %c0_i32_1 = arith.constant 0 : i32
    return %c0_i32, %c0_i32_0 : i32, i32
  }
  func.func @transform_2(%arg0: i32) -> (i32, i32) {
    %c0_i32 = arith.constant 0 : i32
    %c0_i32_0 = arith.constant 0 : i32
    %c0_i32_1 = arith.constant 0 : i32
    return %c0_i32, %c0_i32_0 : i32, i32
  }
  func.func @transform_3(%arg0: i32) -> (i32, i32) {
    %c0_i32 = arith.constant 0 : i32
    %c0_i32_0 = arith.constant 0 : i32
    %c0_i32_1 = arith.constant 0 : i32
    return %c0_i32, %c0_i32_0 : i32, i32
  }
  func.func @transform_4(%arg0: i32) -> (i32, i32) {
    %c0_i32 = arith.constant 0 : i32
    %c0_i32_0 = arith.constant 0 : i32
    %c0_i32_1 = arith.constant 0 : i32
    return %c0_i32, %c0_i32_0 : i32, i32
  }
  func.func @transform_5(%arg0: i32) -> (i32, i32) {
    %c0_i32 = arith.constant 0 : i32
    %c0_i32_0 = arith.constant 0 : i32
    return %arg0, %c0_i32 : i32, i32
  }
}

</mosaic_0001>

<llo_original>
// kernel: tpu_custom_call.1
$region0: #{tpu_custom_call.1}
  #allocation0 [shape = 'u32[]', space=smem, size = 0x4, offset = 0x4, fixed_abs, tag = 'smem constant byte address 0x4 - core index']
  #allocation1 [shape = 'u32[144,128]{1,0:T(1,128)}', space=vmem, size = 0x12000, scoped, tag = 'internal scratch']
  %s0 = inlined_call_operand.vmem [shape: f32[64,32], index: 0, kind: input, shape index: {}]
  %s1 = inlined_call_operand.vmem [shape: f32[32,64], index: 1, kind: input, shape index: {}]
  %s2 = inlined_call_operand.vmem [shape: f32[1,64], index: 2, kind: input, shape index: {}]
  %s3 = inlined_call_operand.vmem [shape: f32[64,32], index: 3, kind: input, shape index: {}]
  %s4 = inlined_call_operand.vmem [shape: f32[1,32], index: 4, kind: input, shape index: {}]
  %s5 = inlined_call_operand.vmem [shape: f32[64,32], index: 5, kind: output, shape index: {}]
  %s6 = sld [smem:[#allocation0]]
  $region30: #{tpu_custom_call.1} parent=0
    _
  %s8 = ssub.s32 1, %s6
  %s9 = scalar_select 0, %s8, %s6
  // Predicated region
  $region2: #{tpu_custom_call.1} parent=0 // pred_check
    _
  $region3: #{tpu_custom_call.1} parent=0 // pred_check_branch
    %11 = sbr.rel (0) target = $region5
  $region4: #{tpu_custom_call.1} parent=0 // pred_region
    _
  $region5: #{tpu_custom_call.1} parent=0 // pred_fallthru
    _
  // Predicated region
  $region6: #{tpu_custom_call.1} parent=0 // pred_check
    _
  $region7: #{tpu_custom_call.1} parent=0 // pred_check_branch
    %13 = sbr.rel (0) target = $region9
  $region8: #{tpu_custom_call.1} parent=0 // pred_region
    _
  $region9: #{tpu_custom_call.1} parent=0 // pred_fallthru
    _
  // Predicated region
  $region10: #{tpu_custom_call.1} parent=0 // pred_check
    _
  $region11: #{tpu_custom_call.1} parent=0 // pred_check_branch
    %15 = sbr.rel (0) target = $region13
  $region12: #{tpu_custom_call.1} parent=0 // pred_region
    _
  $region13: #{tpu_custom_call.1} parent=0 // pred_fallthru
    _
  // Predicated region
  $region14: #{tpu_custom_call.1} parent=0 // pred_check
    _
  $region15: #{tpu_custom_call.1} parent=0 // pred_check_branch
    %17 = sbr.rel (0) target = $region17
  $region16: #{tpu_custom_call.1} parent=0 // pred_region
    _
  $region17: #{tpu_custom_call.1} parent=0 // pred_fallthru
    _
  // Predicated region
  $region18: #{tpu_custom_call.1} parent=0 // pred_check
    _
  $region19: #{tpu_custom_call.1} parent=0 // pred_check_branch
    %19 = sbr.rel (0) target = $region21
  $region20: #{tpu_custom_call.1} parent=0 // pred_region
    _
  $region21: #{tpu_custom_call.1} parent=0 // pred_fallthru
    _
  %v20 = vld [vmem:[%s0] sm:$0xff]
  %v21 = vld [vmem:[%s0 + $0x8] sm:$0xff]
  %v22 = vld [vmem:[%s0 + $0x10] sm:$0xff]
  %v23 = vld [vmem:[%s0 + $0x18] sm:$0xff]
  %v24 = vld [vmem:[%s0 + $0x20] sm:$0xff]
  %v25 = vld [vmem:[%s0 + $0x28] sm:$0xff]
  %v26 = vld [vmem:[%s0 + $0x30] sm:$0xff]
  %v27 = vld [vmem:[%s0 + $0x38] sm:$0xff]
  %v28 = vld [vmem:[%s1] sm:$0xff]
  %v29 = vld [vmem:[%s1 + $0x8] sm:$0xff]
  %v30 = vld [vmem:[%s1 + $0x10] sm:$0xff]
  %v31 = vld [vmem:[%s1 + $0x18] sm:$0xff]
  %v32 = vld [vmem:[%s2] sm:$0x1]
  %v34 = vlaneseq
  %v35 = vshrl.u32 %v34, 7
  %v36 = vsub.s32 0, %v35
  %v37 = vrot.slane %v32, %v36
  %vm39 = vcmask 261120
  %v41 = vsel %vm39, %v20, 0
  %v44 = vsel %vm39, %v21, 0
  %v47 = vsel %vm39, %v22, 0
  %v50 = vsel %vm39, %v23, 0
  %v53 = vsel %vm39, %v24, 0
  %v56 = vsel %vm39, %v25, 0
  %v59 = vsel %vm39, %v26, 0
  %v62 = vsel %vm39, %v27, 0
  %64 = vmatprep.subr.mxu0 0.0
  %65 = vmatpush1.msra.mxu0 0.0
  %66 = vmatprep.subr.mxu0 0.0
  %67 = vmatpush1.msra.mxu0 0.0
  %68 = vmatprep.subr.mxu0 0.0
  %69 = vmatpush1.msra.mxu0 0.0
  %70 = vmatprep.subr.mxu0 0.0
  %71 = vmatpush1.msra.mxu0 0.0
  %72 = vmatprep.subr.mxu0 0.0
  %73 = vmatpush1.msra.mxu0 0.0
  %74 = vmatprep.subr.mxu0 0.0
  %75 = vmatpush1.msra.mxu0 0.0
  %76 = vmatprep.subr.mxu0 0.0
  %77 = vmatpush1.msra.mxu0 0.0
  %78 = vmatprep.subr.mxu0 0.0
  %79 = vmatpush1.msra.mxu0 0.0
  %80 = vmatprep.subr.mxu0 0.0
  %81 = vmatpush1.msra.mxu0 0.0
  %82 = vmatprep.subr.mxu0 0.0
  %83 = vmatpush1.msra.mxu0 0.0
  %84 = vmatprep.subr.mxu0 0.0
  %85 = vmatpush1.msra.mxu0 0.0
  %86 = vmatprep.subr.mxu0 0.0
  %87 = vmatpush1.msra.mxu0 0.0
  %88 = vmatprep.subr.mxu0 0.0
  %89 = vmatpush1.msra.mxu0 %v31
  %90 = vmatprep.subr.mxu0 0.0
  %91 = vmatpush1.msra.mxu0 %v30
  %92 = vmatprep.subr.mxu0 0.0
  %93 = vmatpush1.msra.mxu0 %v29
  %94 = vmatprep.subr.mxu0 0.0
  %95 = vmatpush1.msra.mxu0 %v28
  %96 = vmatprep.subr.mxu0 0.0
  %97 = vmatpush2.msra.mxu0 0.0
  %98 = vmatprep.subr.mxu0 0.0
  %99 = vmatpush2.msra.mxu0 0.0
  %100 = vmatprep.subr.mxu0 0.0
  %101 = vmatpush2.msra.mxu0 0.0
  %102 = vmatprep.subr.mxu0 0.0
  %103 = vmatpush2.msra.mxu0 0.0
  %104 = vmatprep.subr.mxu0 0.0
  %105 = vmatpush2.msra.mxu0 0.0
  %106 = vmatprep.subr.mxu0 0.0
  %107 = vmatpush2.msra.mxu0 0.0
  %108 = vmatprep.subr.mxu0 0.0
  %109 = vmatpush2.msra.mxu0 0.0
  %110 = vmatprep.subr.mxu0 0.0
  %111 = vmatpush2.msra.mxu0 0.0
  %112 = vmatprep.subr.mxu0 0.0
  %113 = vmatpush2.msra.mxu0 0.0
  %114 = vmatprep.subr.mxu0 0.0
  %115 = vmatpush2.msra.mxu0 0.0
  %116 = vmatprep.subr.mxu0 0.0
  %117 = vmatpush2.msra.mxu0 0.0
  %118 = vmatprep.subr.mxu0 0.0
  %119 = vmatpush2.msra.mxu0 0.0
  %120 = vmatprep.subr.mxu0 0.0
  %121 = vmatpush2.msra.mxu0 0.0
  %122 = vmatprep.subr.mxu0 0.0
  %123 = vmatpush2.msra.mxu0 0.0
  %124 = vmatprep.subr.mxu0 0.0
  %125 = vmatpush2.msra.mxu0 0.0
  %126 = vmatprep.subr.mxu0 0.0
  %127 = vmatpush2.msra.mxu0 0.0
  %128 = vmatprep.mubr.f32.mxu0 0.0
  %129 = vmatmul.mubr.f32.gmra.mxu0 %v41
  %v130 = vpop.f32.mrf.mxu0
  %v131 = vadd.f32 %v37, %v130
  %v132 = vpop.f32.mrf.mxu0
  %133 = vmatprep.mubr.f32.mxu0 0.0
  %134 = vmatmul.mubr.f32.gmra.mxu0 %v44
  %v135 = vpop.f32.mrf.mxu0
  %v136 = vadd.f32 %v37, %v135
  %v137 = vpop.f32.mrf.mxu0
  %138 = vmatprep.mubr.f32.mxu0 0.0
  %139 = vmatmul.mubr.f32.gmra.mxu0 %v47
  %v140 = vpop.f32.mrf.mxu0
  %v141 = vadd.f32 %v37, %v140
  %v142 = vpop.f32.mrf.mxu0
  %143 = vmatprep.mubr.f32.mxu0 0.0
  %144 = vmatmul.mubr.f32.gmra.mxu0 %v50
  %v145 = vpop.f32.mrf.mxu0
  %v146 = vadd.f32 %v37, %v145
  %v147 = vpop.f32.mrf.mxu0
  %148 = vmatprep.mubr.f32.mxu0 0.0
  %149 = vmatmul.mubr.f32.gmra.mxu0 %v53
  %v150 = vpop.f32.mrf.mxu0
  %v151 = vadd.f32 %v37, %v150
  %v152 = vpop.f32.mrf.mxu0
  %153 = vmatprep.mubr.f32.mxu0 0.0
  %154 = vmatmul.mubr.f32.gmra.mxu0 %v56
  %v155 = vpop.f32.mrf.mxu0
  %v156 = vadd.f32 %v37, %v155
  %v157 = vpop.f32.mrf.mxu0
  %158 = vmatprep.mubr.f32.mxu0 0.0
  %159 = vmatmul.mubr.f32.gmra.mxu0 %v59
  %v160 = vpop.f32.mrf.mxu0
  %v161 = vadd.f32 %v37, %v160
  %v162 = vpop.f32.mrf.mxu0
  %163 = vmatprep.mubr.f32.mxu0 0.0
  %164 = vmatmul.mubr.f32.gmra.mxu0 %v62
  %v165 = vpop.f32.mrf.mxu0
  %v166 = vadd.f32 %v37, %v165
  %v167 = vpop.f32.mrf.mxu0
  %168 = vdwg.mxu0
  %v169 = vmul.f32 %v131, 0.5
  %v170 = vmul.f32 %v136, 0.5
  %v171 = vmul.f32 %v141, 0.5
  %v172 = vmul.f32 %v146, 0.5
  %v173 = vmul.f32 %v151, 0.5
  %v174 = vmul.f32 %v156, 0.5
  %v175 = vmul.f32 %v161, 0.5
  %v176 = vmul.f32 %v166, 0.5
  %v177 = vmul.f32 %v131, 0.70710677
  %v178 = vmul.f32 %v136, 0.70710677
  %v179 = vmul.f32 %v141, 0.70710677
  %v180 = vmul.f32 %v146, 0.70710677
  %v181 = vmul.f32 %v151, 0.70710677
  %v182 = vmul.f32 %v156, 0.70710677
  %v183 = vmul.f32 %v161, 0.70710677
  %v184 = vmul.f32 %v166, 0.70710677
  %v185 = vand.u32 2147483647, %v177
  %v186 = vand.u32 2147483647, %v178
  %v187 = vand.u32 2147483647, %v179
  %v188 = vand.u32 2147483647, %v180
  %v189 = vand.u32 2147483647, %v181
  %v190 = vand.u32 2147483647, %v182
  %v191 = vand.u32 2147483647, %v183
  %v192 = vand.u32 2147483647, %v184
  %v193 = vmul.f32 %v185, 0.3275911
  %v194 = vmul.f32 %v186, 0.3275911
  %v195 = vmul.f32 %v187, 0.3275911
  %v196 = vmul.f32 %v188, 0.3275911
  %v197 = vmul.f32 %v189, 0.3275911
  %v198 = vmul.f32 %v190, 0.3275911
  %v199 = vmul.f32 %v191, 0.3275911
  %v200 = vmul.f32 %v192, 0.3275911
  %v201 = vadd.f32 %v193, 1.0
  %v202 = vadd.f32 %v194, 1.0
  %v203 = vadd.f32 %v195, 1.0
  %v204 = vadd.f32 %v196, 1.0
  %v205 = vadd.f32 %v197, 1.0
  %v206 = vadd.f32 %v198, 1.0
  %v207 = vadd.f32 %v199, 1.0
  %v208 = vadd.f32 %v200, 1.0
  %v209 = vrcp.pop %v201
  %v210 = vmul.f32 1.0, %v209
  %v211 = vrcp.pop %v202
  %v212 = vmul.f32 1.0, %v211
  %v213 = vrcp.pop %v203
  %v214 = vmul.f32 1.0, %v213
  %v215 = vrcp.pop %v204
  %v216 = vmul.f32 1.0, %v215
  %v217 = vrcp.pop %v205
  %v218 = vmul.f32 1.0, %v217
  %v219 = vrcp.pop %v206
  %v220 = vmul.f32 1.0, %v219
  %v221 = vrcp.pop %v207
  %v222 = vmul.f32 1.0, %v221
  %v223 = vrcp.pop %v208
  %v224 = vmul.f32 1.0, %v223
  %v225 = vmul.f32 %v210, 1.0614054
  %v226 = vmul.f32 %v212, 1.0614054
  %v227 = vmul.f32 %v214, 1.0614054
  %v228 = vmul.f32 %v216, 1.0614054
  %v229 = vmul.f32 %v218, 1.0614054
  %v230 = vmul.f32 %v220, 1.0614054
  %v231 = vmul.f32 %v222, 1.0614054
  %v232 = vmul.f32 %v224, 1.0614054
  %v233 = vadd.f32 %v225, -1.4531521
  %v234 = vadd.f32 %v226, -1.4531521
  %v235 = vadd.f32 %v227, -1.4531521
  %v236 = vadd.f32 %v228, -1.4531521
  %v237 = vadd.f32 %v229, -1.4531521
  %v238 = vadd.f32 %v230, -1.4531521
  %v239 = vadd.f32 %v231, -1.4531521
  %v240 = vadd.f32 %v232, -1.4531521
  %v241 = vmul.f32 %v233, %v210
  %v242 = vmul.f32 %v234, %v212
  %v243 = vmul.f32 %v235, %v214
  %v244 = vmul.f32 %v236, %v216
  %v245 = vmul.f32 %v237, %v218
  %v246 = vmul.f32 %v238, %v220
  %v247 = vmul.f32 %v239, %v222
  %v248 = vmul.f32 %v240, %v224
  %v249 = vadd.f32 %v241, 1.4214138
  %v250 = vadd.f32 %v242, 1.4214138
  %v251 = vadd.f32 %v243, 1.4214138
  %v252 = vadd.f32 %v244, 1.4214138
  %v253 = vadd.f32 %v245, 1.4214138
  %v254 = vadd.f32 %v246, 1.4214138
  %v255 = vadd.f32 %v247, 1.4214138
  %v256 = vadd.f32 %v248, 1.4214138
  %v257 = vmul.f32 %v249, %v210
  %v258 = vmul.f32 %v250, %v212
  %v259 = vmul.f32 %v251, %v214
  %v260 = vmul.f32 %v252, %v216
  %v261 = vmul.f32 %v253, %v218
  %v262 = vmul.f32 %v254, %v220
  %v263 = vmul.f32 %v255, %v222
  %v264 = vmul.f32 %v256, %v224
  %v265 = vadd.f32 %v257, -0.28449672
  %v266 = vadd.f32 %v258, -0.28449672
  %v267 = vadd.f32 %v259, -0.28449672
  %v268 = vadd.f32 %v260, -0.28449672
  %v269 = vadd.f32 %v261, -0.28449672
  %v270 = vadd.f32 %v262, -0.28449672
  %v271 = vadd.f32 %v263, -0.28449672
  %v272 = vadd.f32 %v264, -0.28449672
  %v273 = vmul.f32 %v265, %v210
  %v274 = vmul.f32 %v266, %v212
  %v275 = vmul.f32 %v267, %v214
  %v276 = vmul.f32 %v268, %v216
  %v277 = vmul.f32 %v269, %v218
  %v278 = vmul.f32 %v270, %v220
  %v279 = vmul.f32 %v271, %v222
  %v280 = vmul.f32 %v272, %v224
  %v281 = vadd.f32 %v273, 0.2548296
  %v282 = vadd.f32 %v274, 0.2548296
  %v283 = vadd.f32 %v275, 0.2548296
  %v284 = vadd.f32 %v276, 0.2548296
  %v285 = vadd.f32 %v277, 0.2548296
  %v286 = vadd.f32 %v278, 0.2548296
  %v287 = vadd.f32 %v279, 0.2548296
  %v288 = vadd.f32 %v280, 0.2548296
  %v289 = vmul.f32 %v281, %v210
  %v290 = vmul.f32 %v282, %v212
  %v291 = vmul.f32 %v283, %v214
  %v292 = vmul.f32 %v284, %v216
  %v293 = vmul.f32 %v285, %v218
  %v294 = vmul.f32 %v286, %v220
  %v295 = vmul.f32 %v287, %v222
  %v296 = vmul.f32 %v288, %v224
  %v297 = vsub.f32 0.0, %v185
  %v298 = vsub.f32 0.0, %v186
  %v299 = vsub.f32 0.0, %v187
  %v300 = vsub.f32 0.0, %v188
  %v301 = vsub.f32 0.0, %v189
  %v302 = vsub.f32 0.0, %v190
  %v303 = vsub.f32 0.0, %v191
  %v304 = vsub.f32 0.0, %v192
  %v305 = vmul.f32 %v297, %v185
  %v306 = vmul.f32 %v298, %v186
  %v307 = vmul.f32 %v299, %v187
  %v308 = vmul.f32 %v300, %v188
  %v309 = vmul.f32 %v301, %v189
  %v310 = vmul.f32 %v302, %v190
  %v311 = vmul.f32 %v303, %v191
  %v312 = vmul.f32 %v304, %v192
  %v313 = vmul.f32 %v305, 1.442695
  %v314 = vpow.pop %v313
  %v315 = vmul.f32 %v306, 1.442695
  %v316 = vpow.pop %v315
  %v317 = vmul.f32 %v307, 1.442695
  %v318 = vpow.pop %v317
  %v319 = vmul.f32 %v308, 1.442695
  %v320 = vpow.pop %v319
  %v321 = vmul.f32 %v309, 1.442695
  %v322 = vpow.pop %v321
  %v323 = vmul.f32 %v310, 1.442695
  %v324 = vpow.pop %v323
  %v325 = vmul.f32 %v311, 1.442695
  %v326 = vpow.pop %v325
  %v327 = vmul.f32 %v312, 1.442695
  %v328 = vpow.pop %v327
  %v329 = vmul.f32 %v289, %v314
  %v330 = vmul.f32 %v290, %v316
  %v331 = vmul.f32 %v291, %v318
  %v332 = vmul.f32 %v292, %v320
  %v333 = vmul.f32 %v293, %v322
  %v334 = vmul.f32 %v294, %v324
  %v335 = vmul.f32 %v295, %v326
  %v336 = vmul.f32 %v296, %v328
  %v337 = vsub.f32 1.0, %v329
  %v338 = vsub.f32 1.0, %v330
  %v339 = vsub.f32 1.0, %v331
  %v340 = vsub.f32 1.0, %v332
  %v341 = vsub.f32 1.0, %v333
  %v342 = vsub.f32 1.0, %v334
  %v343 = vsub.f32 1.0, %v335
  %v344 = vsub.f32 1.0, %v336
  %vm345 = vcmp.ge.f32.partialorder %v177, 0.0
  %vm346 = vcmp.ge.f32.partialorder %v178, 0.0
  %vm347 = vcmp.ge.f32.partialorder %v179, 0.0
  %vm348 = vcmp.ge.f32.partialorder %v180, 0.0
  %vm349 = vcmp.ge.f32.partialorder %v181, 0.0
  %vm350 = vcmp.ge.f32.partialorder %v182, 0.0
  %vm351 = vcmp.ge.f32.partialorder %v183, 0.0
  %vm352 = vcmp.ge.f32.partialorder %v184, 0.0
  %v353 = vsub.f32 0.0, %v337
  %v354 = vsub.f32 0.0, %v338
  %v355 = vsub.f32 0.0, %v339
  %v356 = vsub.f32 0.0, %v340
  %v357 = vsub.f32 0.0, %v341
  %v358 = vsub.f32 0.0, %v342
  %v359 = vsub.f32 0.0, %v343
  %v360 = vsub.f32 0.0, %v344
  %v361 = vsel %vm345, %v337, %v353
  %v362 = vsel %vm346, %v338, %v354
  %v363 = vsel %vm347, %v339, %v355
  %v364 = vsel %vm348, %v340, %v356
  %v365 = vsel %vm349, %v341, %v357
  %v366 = vsel %vm350, %v342, %v358
  %v367 = vsel %vm351, %v343, %v359
  %v368 = vsel %vm352, %v344, %v360
  %v369 = vadd.f32 %v361, 1.0
  %v370 = vadd.f32 %v362, 1.0
  %v371 = vadd.f32 %v363, 1.0
  %v372 = vadd.f32 %v364, 1.0
  %v373 = vadd.f32 %v365, 1.0
  %v374 = vadd.f32 %v366, 1.0
  %v375 = vadd.f32 %v367, 1.0
  %v376 = vadd.f32 %v368, 1.0
  %v377 = vmul.f32 %v169, %v369
  %v378 = vmul.f32 %v170, %v370
  %v379 = vmul.f32 %v171, %v371
  %v380 = vmul.f32 %v172, %v372
  %v381 = vmul.f32 %v173, %v373
  %v382 = vmul.f32 %v174, %v374
  %v383 = vmul.f32 %v175, %v375
  %v384 = vmul.f32 %v176, %v376
  %v385 = vld [vmem:[%s3] sm:$0xff]
  %v386 = vld [vmem:[%s3 + $0x8] sm:$0xff]
  %v387 = vld [vmem:[%s3 + $0x10] sm:$0xff]
  %v388 = vld [vmem:[%s3 + $0x18] sm:$0xff]
  %v389 = vld [vmem:[%s3 + $0x20] sm:$0xff]
  %v390 = vld [vmem:[%s3 + $0x28] sm:$0xff]
  %v391 = vld [vmem:[%s3 + $0x30] sm:$0xff]
  %v392 = vld [vmem:[%s3 + $0x38] sm:$0xff]
  %v393 = vld [vmem:[%s4] sm:$0x1]
  %v395 = vlaneseq
  %v396 = vshrl.u32 %v395, 7
  %v397 = vsub.s32 0, %v396
  %v398 = vrot.slane %v393, %v397
  %vm400 = vcmask 523264
  %v402 = vsel %vm400, %v377, 0
  %v405 = vsel %vm400, %v378, 0
  %v408 = vsel %vm400, %v379, 0
  %v411 = vsel %vm400, %v380, 0
  %v414 = vsel %vm400, %v381, 0
  %v417 = vsel %vm400, %v382, 0
  %v420 = vsel %vm400, %v383, 0
  %v423 = vsel %vm400, %v384, 0
  %425 = vmatprep.subr.mxu0 0.0
  %426 = vmatpush1.msra.mxu0 0.0
  %427 = vmatprep.subr.mxu0 0.0
  %428 = vmatpush1.msra.mxu0 0.0
  %429 = vmatprep.subr.mxu0 0.0
  %430 = vmatpush1.msra.mxu0 0.0
  %431 = vmatprep.subr.mxu0 0.0
  %432 = vmatpush1.msra.mxu0 0.0
  %433 = vmatprep.subr.mxu0 0.0
  %434 = vmatpush1.msra.mxu0 0.0
  %435 = vmatprep.subr.mxu0 0.0
  %436 = vmatpush1.msra.mxu0 0.0
  %437 = vmatprep.subr.mxu0 0.0
  %438 = vmatpush1.msra.mxu0 0.0
  %439 = vmatprep.subr.mxu0 0.0
  %440 = vmatpush1.msra.mxu0 0.0
  %441 = vmatprep.subr.mxu0 0.0
  %442 = vmatpush1.msra.mxu0 %v392
  %443 = vmatprep.subr.mxu0 0.0
  %444 = vmatpush1.msra.mxu0 %v391
  %445 = vmatprep.subr.mxu0 0.0
  %446 = vmatpush1.msra.mxu0 %v390
  %447 = vmatprep.subr.mxu0 0.0
  %448 = vmatpush1.msra.mxu0 %v389
  %449 = vmatprep.subr.mxu0 0.0
  %450 = vmatpush1.msra.mxu0 %v388
  %451 = vmatprep.subr.mxu0 0.0
  %452 = vmatpush1.msra.mxu0 %v387
  %453 = vmatprep.subr.mxu0 0.0
  %454 = vmatpush1.msra.mxu0 %v386
  %455 = vmatprep.subr.mxu0 0.0
  %456 = vmatpush1.msra.mxu0 %v385
  %457 = vmatprep.subr.mxu0 0.0
  %458 = vmatpush2.msra.mxu0 0.0
  %459 = vmatprep.subr.mxu0 0.0
  %460 = vmatpush2.msra.mxu0 0.0
  %461 = vmatprep.subr.mxu0 0.0
  %462 = vmatpush2.msra.mxu0 0.0
  %463 = vmatprep.subr.mxu0 0.0
  %464 = vmatpush2.msra.mxu0 0.0
  %465 = vmatprep.subr.mxu0 0.0
  %466 = vmatpush2.msra.mxu0 0.0
  %467 = vmatprep.subr.mxu0 0.0
  %468 = vmatpush2.msra.mxu0 0.0
  %469 = vmatprep.subr.mxu0 0.0
  %470 = vmatpush2.msra.mxu0 0.0
  %471 = vmatprep.subr.mxu0 0.0
  %472 = vmatpush2.msra.mxu0 0.0
  %473 = vmatprep.subr.mxu0 0.0
  %474 = vmatpush2.msra.mxu0 0.0
  %475 = vmatprep.subr.mxu0 0.0
  %476 = vmatpush2.msra.mxu0 0.0
  %477 = vmatprep.subr.mxu0 0.0
  %478 = vmatpush2.msra.mxu0 0.0
  %479 = vmatprep.subr.mxu0 0.0
  %480 = vmatpush2.msra.mxu0 0.0
  %481 = vmatprep.subr.mxu0 0.0
  %482 = vmatpush2.msra.mxu0 0.0
  %483 = vmatprep.subr.mxu0 0.0
  %484 = vmatpush2.msra.mxu0 0.0
  %485 = vmatprep.subr.mxu0 0.0
  %486 = vmatpush2.msra.mxu0 0.0
  %487 = vmatprep.subr.mxu0 0.0
  %488 = vmatpush2.msra.mxu0 0.0
  %489 = vmatprep.mubr.f32.mxu0 0.0
  %490 = vmatmul.mubr.f32.gmra.mxu0 %v402
  %v491 = vpop.f32.mrf.mxu0
  %v492 = vadd.f32 %v398, %v491
  %v493 = vpop.f32.mrf.mxu0
  %494 = vmatprep.mubr.f32.mxu0 0.0
  %495 = vmatmul.mubr.f32.gmra.mxu0 %v405
  %v496 = vpop.f32.mrf.mxu0
  %v497 = vadd.f32 %v398, %v496
  %v498 = vpop.f32.mrf.mxu0
  %499 = vmatprep.mubr.f32.mxu0 0.0
  %500 = vmatmul.mubr.f32.gmra.mxu0 %v408
  %v501 = vpop.f32.mrf.mxu0
  %v502 = vadd.f32 %v398, %v501
  %v503 = vpop.f32.mrf.mxu0
  %504 = vmatprep.mubr.f32.mxu0 0.0
  %505 = vmatmul.mubr.f32.gmra.mxu0 %v411
  %v506 = vpop.f32.mrf.mxu0
  %v507 = vadd.f32 %v398, %v506
  %v508 = vpop.f32.mrf.mxu0
  %509 = vmatprep.mubr.f32.mxu0 0.0
  %510 = vmatmul.mubr.f32.gmra.mxu0 %v414
  %v511 = vpop.f32.mrf.mxu0
  %v512 = vadd.f32 %v398, %v511
  %v513 = vpop.f32.mrf.mxu0
  %514 = vmatprep.mubr.f32.mxu0 0.0
  %515 = vmatmul.mubr.f32.gmra.mxu0 %v417
  %v516 = vpop.f32.mrf.mxu0
  %v517 = vadd.f32 %v398, %v516
  %v518 = vpop.f32.mrf.mxu0
  %519 = vmatprep.mubr.f32.mxu0 0.0
  %520 = vmatmul.mubr.f32.gmra.mxu0 %v420
  %v521 = vpop.f32.mrf.mxu0
  %v522 = vadd.f32 %v398, %v521
  %v523 = vpop.f32.mrf.mxu0
  %524 = vmatprep.mubr.f32.mxu0 0.0
  %525 = vmatmul.mubr.f32.gmra.mxu0 %v423
  %v526 = vpop.f32.mrf.mxu0
  %v527 = vadd.f32 %v398, %v526
  %v528 = vpop.f32.mrf.mxu0
  %529 = vdwg.mxu0
  %530 = vst.msk [vmem:[%s5] sm:$0xff] %vm39, %v492
  %531 = vst.msk [vmem:[%s5 + $0x8] sm:$0xff] %vm39, %v497
  %532 = vst.msk [vmem:[%s5 + $0x10] sm:$0xff] %vm39, %v502
  %533 = vst.msk [vmem:[%s5 + $0x18] sm:$0xff] %vm39, %v507
  %534 = vst.msk [vmem:[%s5 + $0x20] sm:$0xff] %vm39, %v512
  %535 = vst.msk [vmem:[%s5 + $0x28] sm:$0xff] %vm39, %v517
  %536 = vst.msk [vmem:[%s5 + $0x30] sm:$0xff] %vm39, %v522
  %537 = vst.msk [vmem:[%s5 + $0x38] sm:$0xff] %vm39, %v527
  // Predicated region
  $region22: #{tpu_custom_call.1} parent=0 // pred_check
    _
  $region23: #{tpu_custom_call.1} parent=0 // pred_check_branch
    %539 = sbr.rel (0) target = $region25
  $region24: #{tpu_custom_call.1} parent=0 // pred_region
    _
  $region25: #{tpu_custom_call.1} parent=0 // pred_fallthru
    _
  // Predicated region
  $region26: #{tpu_custom_call.1} parent=0 // pred_check
    _
  $region27: #{tpu_custom_call.1} parent=0 // pred_check_branch
    %541 = sbr.rel (0) target = $region29
  $region28: #{tpu_custom_call.1} parent=0 // pred_region
    _
  $region29: #{tpu_custom_call.1} parent=0 // pred_fallthru
    _

</llo_original>
